<compile_context>
chip_gen: v5e
topology: v5e:2x2
jax: 0.10.0
libtpu: 0.0.40
codegen_flags: <defaults>
</compile_context>

<pallas_src>
import functools

import jax
import jax.numpy as jnp
import numpy as np
from jax.experimental import pallas as pl
from jax.experimental.pallas import tpu as pltpu

LN_EPS = 1e-5  # PyTorch nn.LayerNorm default


def _round_up(x, m):
    return (x + m - 1) // m * m


def _layernorm_1pass(h, gamma, beta, n_valid):
    """Single-pass LayerNorm over the last axis.

    Padded columns of h are exactly zero (zero weight cols + zero bias), so
    the sums over the padded width equal the sums over the valid width; we
    divide by the real width `n_valid`.  gamma/beta are zero in padded
    columns, which zeroes those columns back out after normalization.
    """
    inv_n = 1.0 / float(n_valid)
    s = jnp.sum(h, axis=-1, keepdims=True)
    ss = jnp.sum(h * h, axis=-1, keepdims=True)
    mean = s * inv_n
    var = jnp.maximum(ss * inv_n - mean * mean, 0.0)
    inv = jax.lax.rsqrt(var + LN_EPS)
    return (h - mean) * inv * gamma + beta


def _silu(h):
    return h * (1.0 / (1.0 + jnp.exp(-h)))


def c2f_critic_kernel(
    x_ref,
    w1_ref, b1_ref, g1_ref, be1_ref,
    w2_ref, b2_ref, g2_ref, be2_ref,
    wh_ref, bh_ref,
    o_ref,
    *, hidden_valid, matmul_dtype,
):
    x = x_ref[...]

    # Linear 1 + LayerNorm + SiLU   (matmul in matmul_dtype, accumulate f32)
    h = jnp.dot(x.astype(matmul_dtype), w1_ref[...],
                preferred_element_type=jnp.float32) + b1_ref[...]
    h = _layernorm_1pass(h, g1_ref[...], be1_ref[...], hidden_valid)
    h = _silu(h)

    # Linear 2 + LayerNorm + SiLU
    h = jnp.dot(h.astype(matmul_dtype), w2_ref[...],
                preferred_element_type=jnp.float32) + b2_ref[...]
    h = _layernorm_1pass(h, g2_ref[...], be2_ref[...], hidden_valid)
    h = _silu(h)

    # Head
    o_ref[...] = (
        jnp.dot(h.astype(matmul_dtype), wh_ref[...],
                preferred_element_type=jnp.float32) + bh_ref[...]
    ).astype(o_ref.dtype)


def _pad2(a, rows, cols):
    return jnp.pad(a, ((0, rows - a.shape[0]), (0, cols - a.shape[1])))


def _pad_row(v, cols):
    v = v.reshape(1, -1)
    return jnp.pad(v, ((0, 0), (0, cols - v.shape[1])))


def c2f_critic_forward(params, obs, prev_actions, *, levels, actor_dim, bins,
                       tile_n=512, use_bf16_matmul=False):
    """JAX wrapper reproducing C2FCriticNetwork.forward."""
    B = prev_actions.shape[0]
    L = prev_actions.shape[1]
    prev_actions = prev_actions.reshape(B, L, actor_dim)
    assert L == levels

    low_dim = obs.shape[-1]
    din = low_dim + actor_dim + L
    hidden = params["w1"].shape[1]
    out_dim = params["wh"].shape[1]

    # ---- build the concatenated input (wrapper glue) ----
    level_id = jnp.broadcast_to(jnp.eye(L, dtype=obs.dtype)[None, :, :], (B, L, L))
    obs_rep = jnp.broadcast_to(obs[:, None, :], (B, L, low_dim))
    x = jnp.concatenate([obs_rep, prev_actions, level_id], axis=-1)  # (B, L, din)
    N = B * L
    x = x.reshape(N, din)

    # ---- lane padding (multiples of 128) ----
    din_p = _round_up(din, 128)
    h_p = _round_up(hidden, 128)
    dout_p = _round_up(out_dim, 128)

    matmul_dtype = jnp.bfloat16 if use_bf16_matmul else jnp.float32
    w_bytes = 2 if use_bf16_matmul else 4
    act_bytes = 2 if use_bf16_matmul else 4
    weight_elems = din_p * h_p + h_p * h_p + h_p * dout_p

    # ---- row tiling (multiple of 16 so both f32 and bf16 tilings work) ----
    def vmem_need(t):
        return (
            2 * t * din_p * act_bytes           # x, double-buffered
            + 2 * t * dout_p * 4                # out, double-buffered
            + 2 * weight_elems * w_bytes        # resident weights (buffered)
            + 2 * (6 * h_p + dout_p) * 4        # biases / LN params
            + 6 * t * h_p * 4                   # live f32 intermediates
        )

    tile = min(tile_n, _round_up(N, 16))
    tile = max(16, _round_up(tile, 16))
    budget = 40 << 20                           # stay well inside v7x's 64 MiB
    while tile > 16 and vmem_need(tile) > budget:
        tile = max(16, _round_up(tile // 2, 16))

    n_pad = _round_up(N, tile)
    grid = (n_pad // tile,)

    x = jnp.pad(x, ((0, n_pad - N), (0, din_p - din)))

    # ---- zero-padded params ----
    w1 = _pad2(params["w1"], din_p, h_p)
    w2 = _pad2(params["w2"], h_p, h_p)
    wh = _pad2(params["wh"], h_p, dout_p)
    b1 = _pad_row(params["b1"], h_p)
    g1 = _pad_row(params["g1"], h_p)
    be1 = _pad_row(params["be1"], h_p)
    b2 = _pad_row(params["b2"], h_p)
    g2 = _pad_row(params["g2"], h_p)
    be2 = _pad_row(params["be2"], h_p)
    bh = _pad_row(params["bh"], dout_p)

    if use_bf16_matmul:
        # bf16 operands for the MXU / HBM traffic; LN & SiLU stay f32 in-kernel.
        x = x.astype(jnp.bfloat16)
        w1 = w1.astype(jnp.bfloat16)
        w2 = w2.astype(jnp.bfloat16)
        wh = wh.astype(jnp.bfloat16)

    # ---- block specs: x / out tiled over rows, params resident ----
    x_spec = pl.BlockSpec((tile, din_p), lambda i: (i, 0))
    out_spec = pl.BlockSpec((tile, dout_p), lambda i: (i, 0))

    def resident(shape):
        return pl.BlockSpec(shape, lambda i: (0, 0))

    in_specs = [
        x_spec,
        resident((din_p, h_p)), resident((1, h_p)), resident((1, h_p)), resident((1, h_p)),
        resident((h_p, h_p)), resident((1, h_p)), resident((1, h_p)), resident((1, h_p)),
        resident((h_p, dout_p)), resident((1, dout_p)),
    ]

    # ---- cost estimate + VMEM budget ----
    flops = 2 * n_pad * weight_elems
    transcendentals = 2 * n_pad * h_p  # exp in SiLU, twice
    bytes_accessed = (
        n_pad * din_p * act_bytes
        + weight_elems * w_bytes
        + (6 * h_p + dout_p) * 4
        + n_pad * dout_p * 4
    )
    cost = pl.CostEstimate(flops=flops, transcendentals=transcendentals,
                           bytes_accessed=bytes_accessed)

    vmem_limit = int(min(max(vmem_need(tile) + (2 << 20), 8 << 20), 48 << 20))

    kernel = functools.partial(
        c2f_critic_kernel, hidden_valid=hidden, matmul_dtype=matmul_dtype
    )

    out = pl.pallas_call(
        kernel,
        out_shape=jax.ShapeDtypeStruct((n_pad, dout_p), jnp.float32),
        grid=grid,
        in_specs=in_specs,
        out_specs=out_spec,
        compiler_params=pltpu.CompilerParams(
            dimension_semantics=("parallel",),
            vmem_limit_bytes=vmem_limit,
        ),
        cost_estimate=cost,
    )(x, w1, b1, g1, be1, w2, b2, g2, be2, wh, bh)

    q = out[:N, :out_dim].reshape(B, L, actor_dim, bins)
    return q


def _layernorm_ref(h, gamma, beta):
    mean = jnp.mean(h, axis=-1, keepdims=True)
    var = jnp.mean((h - mean) ** 2, axis=-1, keepdims=True)
    inv = jax.lax.rsqrt(var + LN_EPS)
    return (h - mean) * inv * gamma + beta


def c2f_critic_reference(params, obs, prev_actions, *, levels, actor_dim, bins):
    """Pure-JAX reference for correctness checking."""
    B = prev_actions.shape[0]
    L = prev_actions.shape[1]
    prev_actions = prev_actions.reshape(B, L, actor_dim)
    level_id = jnp.broadcast_to(jnp.eye(L, dtype=obs.dtype)[None], (B, L, L))
    obs_rep = jnp.broadcast_to(obs[:, None, :], (B, L, obs.shape[-1]))
    x = jnp.concatenate([obs_rep, prev_actions, level_id], axis=-1)

    h = x @ params["w1"] + params["b1"]
    h = _layernorm_ref(h, params["g1"], params["be1"])
    h = _silu(h)
    h = h @ params["w2"] + params["b2"]
    h = _layernorm_ref(h, params["g2"], params["be2"])
    h = _silu(h)
    q = h @ params["wh"] + params["bh"]
    return q.reshape(B, L, actor_dim, bins)


def init_params(key, low_dim, actor_dim, levels, bins, hidden_dim):
    """Deterministic synthetic parameters (shapes match the PyTorch __init__)."""
    Din = low_dim + actor_dim + levels
    out_dim = actor_dim * bins
    ks = jax.random.split(key, 6)

    def lin(k, fan_in, fan_out):
        return jax.random.normal(k, (fan_in, fan_out), jnp.float32) / np.sqrt(fan_in)

    # NOTE: the PyTorch module zero-fills the head; here we use small nonzero
    # deterministic values so the kernel-vs-reference check is non-trivial.
    return {
        "w1": lin(ks[0], Din, hidden_dim),
        "b1": jax.random.normal(ks[1], (hidden_dim,), jnp.float32) * 0.01,
        "g1": jnp.ones((hidden_dim,), jnp.float32),
        "be1": jnp.zeros((hidden_dim,), jnp.float32),
        "w2": lin(ks[2], hidden_dim, hidden_dim),
        "b2": jax.random.normal(ks[3], (hidden_dim,), jnp.float32) * 0.01,
        "g2": jnp.ones((hidden_dim,), jnp.float32),
        "be2": jnp.zeros((hidden_dim,), jnp.float32),
        "wh": lin(ks[4], hidden_dim, out_dim) * 0.1,
        "bh": jax.random.normal(ks[5], (out_dim,), jnp.float32) * 0.01,
    }


if __name__ == "__main__":
    # Small shapes consistent with the module.
    B = 2
    low_dim = 24
    actor_dim = 4
    levels = 3
    bins = 5
    hidden_dim = 32

    key = jax.random.PRNGKey(0)
    kp, ko, ka = jax.random.split(key, 3)

    params = init_params(kp, low_dim, actor_dim, levels, bins, hidden_dim)
    obs = jax.random.normal(ko, (B, low_dim), jnp.float32)
    prev_actions = jax.random.normal(ka, (B, levels, actor_dim), jnp.float32)

    q_ref = c2f_critic_reference(
        params, obs, prev_actions, levels=levels, actor_dim=actor_dim, bins=bins
    )

    # f32 path (tight tolerance)
    fwd = functools.partial(
        c2f_critic_forward, levels=levels, actor_dim=actor_dim, bins=bins,
        use_bf16_matmul=False,
    )
    q = jax.block_until_ready(fwd(params, obs, prev_actions))
    assert q.shape == (B, levels, actor_dim, bins), q.shape
    np.testing.assert_allclose(np.asarray(q), np.asarray(q_ref), rtol=1e-4, atol=1e-4)

    # bf16-matmul path (looser tolerance, exercises the MXU-friendly config)
    fwd_bf16 = functools.partial(
        c2f_critic_forward, levels=levels, actor_dim=actor_dim, bins=bins,
        use_bf16_matmul=True,
    )
    q16 = jax.block_until_ready(fwd_bf16(params, obs, prev_actions))
    np.testing.assert_allclose(np.asarray(q16), np.asarray(q_ref), rtol=3e-2, atol=3e-2)

    print("KERNEL_OK")
</pallas_src>

<mosaic_0001>
module attributes {stable_mosaic.version = 11 : i64} {
  func.func @c2f_critic_kernel(%arg0: i32, %arg1: memref<16x128xf32, #tpu.memory_space<vmem>>, %arg2: memref<128x128xf32, #tpu.memory_space<vmem>>, %arg3: memref<1x128xf32, #tpu.memory_space<vmem>>, %arg4: memref<1x128xf32, #tpu.memory_space<vmem>>, %arg5: memref<1x128xf32, #tpu.memory_space<vmem>>, %arg6: memref<128x128xf32, #tpu.memory_space<vmem>>, %arg7: memref<1x128xf32, #tpu.memory_space<vmem>>, %arg8: memref<1x128xf32, #tpu.memory_space<vmem>>, %arg9: memref<1x128xf32, #tpu.memory_space<vmem>>, %arg10: memref<128x128xf32, #tpu.memory_space<vmem>>, %arg11: memref<1x128xf32, #tpu.memory_space<vmem>>, %arg12: memref<16x128xf32, #tpu.memory_space<vmem>>) attributes {dimension_semantics = [#tpu.dimension_semantics<parallel>], iteration_bounds = array<i64: 1>, scalar_prefetch = 0 : i64, scratch_operands = 0 : i64, tpu.core_type = #tpu.core_type<tc>, window_params = [{transform_indices = @transform_0, window_bounds = array<i64: 16, 128>}, {pipeline_mode = #tpu.pipeline_mode<synchronous>, transform_indices = @transform_1, window_bounds = array<i64: 128, 128>}, {pipeline_mode = #tpu.pipeline_mode<synchronous>, transform_indices = @transform_2, window_bounds = array<i64: 1, 128>}, {pipeline_mode = #tpu.pipeline_mode<synchronous>, transform_indices = @transform_3, window_bounds = array<i64: 1, 128>}, {pipeline_mode = #tpu.pipeline_mode<synchronous>, transform_indices = @transform_4, window_bounds = array<i64: 1, 128>}, {pipeline_mode = #tpu.pipeline_mode<synchronous>, transform_indices = @transform_5, window_bounds = array<i64: 128, 128>}, {pipeline_mode = #tpu.pipeline_mode<synchronous>, transform_indices = @transform_6, window_bounds = array<i64: 1, 128>}, {pipeline_mode = #tpu.pipeline_mode<synchronous>, transform_indices = @transform_7, window_bounds = array<i64: 1, 128>}, {pipeline_mode = #tpu.pipeline_mode<synchronous>, transform_indices = @transform_8, window_bounds = array<i64: 1, 128>}, {pipeline_mode = #tpu.pipeline_mode<synchronous>, transform_indices = @transform_9, window_bounds = array<i64: 128, 128>}, {pipeline_mode = #tpu.pipeline_mode<synchronous>, transform_indices = @transform_10, window_bounds = array<i64: 1, 128>}, {transform_indices = @transform_11, window_bounds = array<i64: 16, 128>}]} {
    %c0 = arith.constant 0 : index
    %c0_0 = arith.constant 0 : index
    %0 = vector.load %arg1[%c0, %c0_0] : memref<16x128xf32, #tpu.memory_space<vmem>>, vector<16x128xf32>
    %c0_1 = arith.constant 0 : index
    %c0_2 = arith.constant 0 : index
    %1 = vector.load %arg2[%c0_1, %c0_2] : memref<128x128xf32, #tpu.memory_space<vmem>>, vector<128x128xf32>
    %cst = arith.constant dense<0.000000e+00> : vector<16x128xf32>
    %2 = tpu.matmul %0, %1, %cst {dimension_numbers = #tpu.dot_dimension_numbers<[1], [0], [0], [1], [0, 0, 1, 1], [], []>} : vector<16x128xf32>, vector<128x128xf32>, vector<16x128xf32> -> vector<16x128xf32>
    %c0_3 = arith.constant 0 : index
    %c0_4 = arith.constant 0 : index
    %3 = vector.load %arg3[%c0_3, %c0_4] : memref<1x128xf32, #tpu.memory_space<vmem>>, vector<1x128xf32>
    %4 = vector.broadcast %3 : vector<1x128xf32> to vector<16x128xf32>
    %5 = arith.addf %2, %4 : vector<16x128xf32>
    %c0_5 = arith.constant 0 : index
    %c0_6 = arith.constant 0 : index
    %6 = vector.load %arg4[%c0_5, %c0_6] : memref<1x128xf32, #tpu.memory_space<vmem>>, vector<1x128xf32>
    %c0_7 = arith.constant 0 : index
    %c0_8 = arith.constant 0 : index
    %7 = vector.load %arg5[%c0_7, %c0_8] : memref<1x128xf32, #tpu.memory_space<vmem>>, vector<1x128xf32>
    %cst_9 = arith.constant dense<0.000000e+00> : vector<16xf32>
    %8 = vector.multi_reduction <add>, %5, %cst_9 [1] : vector<16x128xf32> to vector<16xf32>
    %9 = vector.shape_cast %8 : vector<16xf32> to vector<16x1xf32>
    %10 = arith.mulf %5, %5 : vector<16x128xf32>
    %cst_10 = arith.constant dense<0.000000e+00> : vector<16xf32>
    %11 = vector.multi_reduction <add>, %10, %cst_10 [1] : vector<16x128xf32> to vector<16xf32>
    %12 = vector.shape_cast %11 : vector<16xf32> to vector<16x1xf32>
    %cst_11 = arith.constant 3.125000e-02 : f32
    %13 = vector.broadcast %cst_11 : f32 to vector<16x1xf32>
    %14 = arith.mulf %9, %13 : vector<16x1xf32>
    %cst_12 = arith.constant 3.125000e-02 : f32
    %15 = vector.broadcast %cst_12 : f32 to vector<16x1xf32>
    %16 = arith.mulf %12, %15 : vector<16x1xf32>
    %17 = arith.mulf %14, %14 : vector<16x1xf32>
    %18 = arith.subf %16, %17 : vector<16x1xf32>
    %cst_13 = arith.constant 0.000000e+00 : f32
    %19 = vector.broadcast %cst_13 : f32 to vector<16x1xf32>
    %20 = arith.maximumf %18, %19 : vector<16x1xf32>
    %cst_14 = arith.constant 9.99999974E-6 : f32
    %21 = vector.broadcast %cst_14 : f32 to vector<16x1xf32>
    %22 = arith.addf %20, %21 : vector<16x1xf32>
    %23 = math.rsqrt %22 : vector<16x1xf32>
    %24 = vector.broadcast %14 : vector<16x1xf32> to vector<16x128xf32>
    %25 = arith.subf %5, %24 : vector<16x128xf32>
    %26 = vector.broadcast %23 : vector<16x1xf32> to vector<16x128xf32>
    %27 = arith.mulf %25, %26 : vector<16x128xf32>
    %28 = vector.broadcast %6 : vector<1x128xf32> to vector<16x128xf32>
    %29 = arith.mulf %27, %28 : vector<16x128xf32>
    %30 = vector.broadcast %7 : vector<1x128xf32> to vector<16x128xf32>
    %31 = arith.addf %29, %30 : vector<16x128xf32>
    %cst_15 = arith.constant 0.000000e+00 : f32
    %32 = vector.broadcast %cst_15 : f32 to vector<16x128xf32>
    %33 = arith.subf %32, %31 : vector<16x128xf32>
    %34 = math.exp %33 : vector<16x128xf32>
    %cst_16 = arith.constant 1.000000e+00 : f32
    %35 = vector.broadcast %cst_16 : f32 to vector<16x128xf32>
    %36 = arith.addf %35, %34 : vector<16x128xf32>
    %cst_17 = arith.constant 1.000000e+00 : f32
    %37 = vector.broadcast %cst_17 : f32 to vector<16x128xf32>
    %38 = arith.divf %37, %36 : vector<16x128xf32>
    %39 = arith.mulf %31, %38 : vector<16x128xf32>
    %c0_18 = arith.constant 0 : index
    %c0_19 = arith.constant 0 : index
    %40 = vector.load %arg6[%c0_18, %c0_19] : memref<128x128xf32, #tpu.memory_space<vmem>>, vector<128x128xf32>
    %cst_20 = arith.constant dense<0.000000e+00> : vector<16x128xf32>
    %41 = tpu.matmul %39, %40, %cst_20 {dimension_numbers = #tpu.dot_dimension_numbers<[1], [0], [0], [1], [0, 0, 1, 1], [], []>} : vector<16x128xf32>, vector<128x128xf32>, vector<16x128xf32> -> vector<16x128xf32>
    %c0_21 = arith.constant 0 : index
    %c0_22 = arith.constant 0 : index
    %42 = vector.load %arg7[%c0_21, %c0_22] : memref<1x128xf32, #tpu.memory_space<vmem>>, vector<1x128xf32>
    %43 = vector.broadcast %42 : vector<1x128xf32> to vector<16x128xf32>
    %44 = arith.addf %41, %43 : vector<16x128xf32>
    %c0_23 = arith.constant 0 : index
    %c0_24 = arith.constant 0 : index
    %45 = vector.load %arg8[%c0_23, %c0_24] : memref<1x128xf32, #tpu.memory_space<vmem>>, vector<1x128xf32>
    %c0_25 = arith.constant 0 : index
    %c0_26 = arith.constant 0 : index
    %46 = vector.load %arg9[%c0_25, %c0_26] : memref<1x128xf32, #tpu.memory_space<vmem>>, vector<1x128xf32>
    %cst_27 = arith.constant dense<0.000000e+00> : vector<16xf32>
    %47 = vector.multi_reduction <add>, %44, %cst_27 [1] : vector<16x128xf32> to vector<16xf32>
    %48 = vector.shape_cast %47 : vector<16xf32> to vector<16x1xf32>
    %49 = arith.mulf %44, %44 : vector<16x128xf32>
    %cst_28 = arith.constant dense<0.000000e+00> : vector<16xf32>
    %50 = vector.multi_reduction <add>, %49, %cst_28 [1] : vector<16x128xf32> to vector<16xf32>
    %51 = vector.shape_cast %50 : vector<16xf32> to vector<16x1xf32>
    %cst_29 = arith.constant 3.125000e-02 : f32
    %52 = vector.broadcast %cst_29 : f32 to vector<16x1xf32>
    %53 = arith.mulf %48, %52 : vector<16x1xf32>
    %cst_30 = arith.constant 3.125000e-02 : f32
    %54 = vector.broadcast %cst_30 : f32 to vector<16x1xf32>
    %55 = arith.mulf %51, %54 : vector<16x1xf32>
    %56 = arith.mulf %53, %53 : vector<16x1xf32>
    %57 = arith.subf %55, %56 : vector<16x1xf32>
    %cst_31 = arith.constant 0.000000e+00 : f32
    %58 = vector.broadcast %cst_31 : f32 to vector<16x1xf32>
    %59 = arith.maximumf %57, %58 : vector<16x1xf32>
    %cst_32 = arith.constant 9.99999974E-6 : f32
    %60 = vector.broadcast %cst_32 : f32 to vector<16x1xf32>
    %61 = arith.addf %59, %60 : vector<16x1xf32>
    %62 = math.rsqrt %61 : vector<16x1xf32>
    %63 = vector.broadcast %53 : vector<16x1xf32> to vector<16x128xf32>
    %64 = arith.subf %44, %63 : vector<16x128xf32>
    %65 = vector.broadcast %62 : vector<16x1xf32> to vector<16x128xf32>
    %66 = arith.mulf %64, %65 : vector<16x128xf32>
    %67 = vector.broadcast %45 : vector<1x128xf32> to vector<16x128xf32>
    %68 = arith.mulf %66, %67 : vector<16x128xf32>
    %69 = vector.broadcast %46 : vector<1x128xf32> to vector<16x128xf32>
    %70 = arith.addf %68, %69 : vector<16x128xf32>
    %cst_33 = arith.constant 0.000000e+00 : f32
    %71 = vector.broadcast %cst_33 : f32 to vector<16x128xf32>
    %72 = arith.subf %71, %70 : vector<16x128xf32>
    %73 = math.exp %72 : vector<16x128xf32>
    %cst_34 = arith.constant 1.000000e+00 : f32
    %74 = vector.broadcast %cst_34 : f32 to vector<16x128xf32>
    %75 = arith.addf %74, %73 : vector<16x128xf32>
    %cst_35 = arith.constant 1.000000e+00 : f32
    %76 = vector.broadcast %cst_35 : f32 to vector<16x128xf32>
    %77 = arith.divf %76, %75 : vector<16x128xf32>
    %78 = arith.mulf %70, %77 : vector<16x128xf32>
    %c0_36 = arith.constant 0 : index
    %c0_37 = arith.constant 0 : index
    %79 = vector.load %arg10[%c0_36, %c0_37] : memref<128x128xf32, #tpu.memory_space<vmem>>, vector<128x128xf32>
    %cst_38 = arith.constant dense<0.000000e+00> : vector<16x128xf32>
    %80 = tpu.matmul %78, %79, %cst_38 {dimension_numbers = #tpu.dot_dimension_numbers<[1], [0], [0], [1], [0, 0, 1, 1], [], []>} : vector<16x128xf32>, vector<128x128xf32>, vector<16x128xf32> -> vector<16x128xf32>
    %c0_39 = arith.constant 0 : index
    %c0_40 = arith.constant 0 : index
    %81 = vector.load %arg11[%c0_39, %c0_40] : memref<1x128xf32, #tpu.memory_space<vmem>>, vector<1x128xf32>
    %82 = vector.broadcast %81 : vector<1x128xf32> to vector<16x128xf32>
    %83 = arith.addf %80, %82 : vector<16x128xf32>
    %c0_41 = arith.constant 0 : index
    %c0_42 = arith.constant 0 : index
    %84 = vector.load %arg12[%c0_41, %c0_42] : memref<16x128xf32, #tpu.memory_space<vmem>>, vector<16x128xf32>
    tpu.vector_store %arg12[%c0_41, %c0_42], %83 {strides = array<i32>} : memref<16x128xf32, #tpu.memory_space<vmem>>, vector<16x128xf32>,
    return
  }
  func.func @transform_0(%arg0: i32) -> (i32, i32) {
    %c0_i32 = arith.constant 0 : i32
    %c0_i32_0 = arith.constant 0 : i32
    return %arg0, %c0_i32 : i32, i32
  }
  func.func @transform_1(%arg0: i32) -> (i32, i32) {
    %c0_i32 = arith.constant 0 : i32
    %c0_i32_0 = arith.constant 0 : i32
    %c0_i32_1 = arith.constant 0 : i32
    return %c0_i32, %c0_i32_0 : i32, i32
  }
  func.func @transform_2(%arg0: i32) -> (i32, i32) {
    %c0_i32 = arith.constant 0 : i32
    %c0_i32_0 = arith.constant 0 : i32
    %c0_i32_1 = arith.constant 0 : i32
    return %c0_i32, %c0_i32_0 : i32, i32
  }
  func.func @transform_3(%arg0: i32) -> (i32, i32) {
    %c0_i32 = arith.constant 0 : i32
    %c0_i32_0 = arith.constant 0 : i32
    %c0_i32_1 = arith.constant 0 : i32
    return %c0_i32, %c0_i32_0 : i32, i32
  }
  func.func @transform_4(%arg0: i32) -> (i32, i32) {
    %c0_i32 = arith.constant 0 : i32
    %c0_i32_0 = arith.constant 0 : i32
    %c0_i32_1 = arith.constant 0 : i32
    return %c0_i32, %c0_i32_0 : i32, i32
  }
  func.func @transform_5(%arg0: i32) -> (i32, i32) {
    %c0_i32 = arith.constant 0 : i32
    %c0_i32_0 = arith.constant 0 : i32
    %c0_i32_1 = arith.constant 0 : i32
    return %c0_i32, %c0_i32_0 : i32, i32
  }
  func.func @transform_6(%arg0: i32) -> (i32, i32) {
    %c0_i32 = arith.constant 0 : i32
    %c0_i32_0 = arith.constant 0 : i32
    %c0_i32_1 = arith.constant 0 : i32
    return %c0_i32, %c0_i32_0 : i32, i32
  }
  func.func @transform_7(%arg0: i32) -> (i32, i32) {
    %c0_i32 = arith.constant 0 : i32
    %c0_i32_0 = arith.constant 0 : i32
    %c0_i32_1 = arith.constant 0 : i32
    return %c0_i32, %c0_i32_0 : i32, i32
  }
  func.func @transform_8(%arg0: i32) -> (i32, i32) {
    %c0_i32 = arith.constant 0 : i32
    %c0_i32_0 = arith.constant 0 : i32
    %c0_i32_1 = arith.constant 0 : i32
    return %c0_i32, %c0_i32_0 : i32, i32
  }
  func.func @transform_9(%arg0: i32) -> (i32, i32) {
    %c0_i32 = arith.constant 0 : i32
    %c0_i32_0 = arith.constant 0 : i32
    %c0_i32_1 = arith.constant 0 : i32
    return %c0_i32, %c0_i32_0 : i32, i32
  }
  func.func @transform_10(%arg0: i32) -> (i32, i32) {
    %c0_i32 = arith.constant 0 : i32
    %c0_i32_0 = arith.constant 0 : i32
    %c0_i32_1 = arith.constant 0 : i32
    return %c0_i32, %c0_i32_0 : i32, i32
  }
  func.func @transform_11(%arg0: i32) -> (i32, i32) {
    %c0_i32 = arith.constant 0 : i32
    %c0_i32_0 = arith.constant 0 : i32
    return %arg0, %c0_i32 : i32, i32
  }
}

</mosaic_0001>

<llo_original>
// kernel: tpu_custom_call.1
$region0: #{tpu_custom_call.1}
  #allocation0 [shape = 'u32[]', space=smem, size = 0x4, offset = 0x4, fixed_abs, tag = 'smem constant byte address 0x4 - core index']
  #allocation1 [shape = 'u32[72,128]{1,0:T(1,128)}', space=vmem, size = 0x9000, scoped, tag = 'internal scratch']
  %s0 = inlined_call_operand.hbm [shape: f32[16,128], index: 0, kind: input, shape index: {}]
  %s1 = inlined_call_operand.hbm [shape: f32[128,128], index: 1, kind: input, shape index: {}]
  %s2 = inlined_call_operand.vmem [shape: f32[1,128], index: 2, kind: input, shape index: {}]
  %s3 = inlined_call_operand.vmem [shape: f32[1,128], index: 3, kind: input, shape index: {}]
  %s4 = inlined_call_operand.vmem [shape: f32[1,128], index: 4, kind: input, shape index: {}]
  %s5 = inlined_call_operand.hbm [shape: f32[128,128], index: 5, kind: input, shape index: {}]
  %s6 = inlined_call_operand.vmem [shape: f32[1,128], index: 6, kind: input, shape index: {}]
  %s7 = inlined_call_operand.vmem [shape: f32[1,128], index: 7, kind: input, shape index: {}]
  %s8 = inlined_call_operand.vmem [shape: f32[1,128], index: 8, kind: input, shape index: {}]
  %s9 = inlined_call_operand.hbm [shape: f32[128,128], index: 9, kind: input, shape index: {}]
  %s10 = inlined_call_operand.vmem [shape: f32[1,128], index: 10, kind: input, shape index: {}]
  %s11 = inlined_call_operand.hbm [shape: f32[16,128], index: 11, kind: output, shape index: {}]
  %s12 = sld [smem:[#allocation0]]
  $region70: #{tpu_custom_call.1} parent=0
    _
  %s14 = ssub.s32 1, %s12
  %s15 = scalar_select 0, %s14, %s12
  $region1: #{tpu_custom_call.1} parent=0
    #allocation2 [shape = 'u8[8192]{0}', space=vmem, size = 0x2000, scoped, tag = 'input window, operand 0, single buffered']
    #allocation3 [shape = 's32[1]{0}', space=sflag, size = 0x4, scoped, tag = 'scoped memory for tpu_custom_call.1']
    #allocation4 [shape = 's32[1]{0}', space=sflag, size = 0x4, scoped, tag = 'scoped memory for tpu_custom_call.1']
    #allocation5 [shape = 'u8[65536]{0}', space=vmem, size = 0x10000, scoped, tag = 'input window, operand 1, single buffered']
    #allocation6 [shape = 's32[1]{0}', space=sflag, size = 0x4, scoped, tag = 'scoped memory for tpu_custom_call.1']
    #allocation7 [shape = 'u8[65536]{0}', space=vmem, size = 0x10000, scoped, tag = 'input window, operand 5, single buffered']
    #allocation8 [shape = 'u8[65536]{0}', space=vmem, size = 0x10000, scoped, tag = 'input window, operand 9, single buffered']
    #allocation9 [shape = 's32[1]{0}', space=sflag, size = 0x4, scoped, tag = 'scoped memory for tpu_custom_call.1']
    #allocation10 [shape = 'u8[8192]{0}', space=vmem, size = 0x2000, scoped, tag = 'output window, operand 0, single buffered']
    %16 = vsyncpa [#allocation3], 0
    %17 = vsyncpa [#allocation6], 0
    %18 = vsyncpa [#allocation9], 0
    %19 = vsyncpa [#allocation4], 0
    // Predicated region
    $region2: #{tpu_custom_call.1} parent=1 // pred_check
      _
    $region3: #{tpu_custom_call.1} parent=1 // pred_check_branch
      %21 = sbr.rel (0) target = $region5
    $region4: #{tpu_custom_call.1} parent=1 // pred_region
      %23 = vsyncadd [#allocation3], 0
      %s24 = sshll.u32 %s0, 4
      %s25 = int_to_ptr.hbm [resolvable:$true] %s24
      %s26 = sshll.u32 [#allocation2], 4
      %s27 = int_to_ptr.vmem [resolvable:$true] %s26
      %32 = dma.hbm_to_vmem [thread:$0]  %s25, 256, %s27, [#allocation3], 128, 128, 8
    $region5: #{tpu_custom_call.1} parent=1 // pred_fallthru
      _
    // Predicated region
    $region6: #{tpu_custom_call.1} parent=1 // pred_check
      _
    $region7: #{tpu_custom_call.1} parent=1 // pred_check_branch
      %34 = sbr.rel (0) target = $region9
    $region8: #{tpu_custom_call.1} parent=1 // pred_region
      %36 = vsyncadd [#allocation6], 0
      %s37 = sshll.u32 %s1, 4
      %s38 = int_to_ptr.hbm [resolvable:$true] %s37
      %s39 = sshll.u32 [#allocation5], 4
      %s40 = int_to_ptr.vmem [resolvable:$true] %s39
      %45 = dma.hbm_to_vmem [thread:$0]  %s38, 2048, %s40, [#allocation6], 128, 128, 8
    $region9: #{tpu_custom_call.1} parent=1 // pred_fallthru
      _
    // Predicated region
    $region10: #{tpu_custom_call.1} parent=1 // pred_check
      _
    $region11: #{tpu_custom_call.1} parent=1 // pred_check_branch
      %47 = sbr.rel (0) target = $region13
    $region12: #{tpu_custom_call.1} parent=1 // pred_region
      _
    $region13: #{tpu_custom_call.1} parent=1 // pred_fallthru
      _
    // Predicated region
    $region14: #{tpu_custom_call.1} parent=1 // pred_check
      _
    $region15: #{tpu_custom_call.1} parent=1 // pred_check_branch
      %49 = sbr.rel (0) target = $region17
    $region16: #{tpu_custom_call.1} parent=1 // pred_region
      _
    $region17: #{tpu_custom_call.1} parent=1 // pred_fallthru
      _
    // Predicated region
    $region18: #{tpu_custom_call.1} parent=1 // pred_check
      _
    $region19: #{tpu_custom_call.1} parent=1 // pred_check_branch
      %51 = sbr.rel (0) target = $region21
    $region20: #{tpu_custom_call.1} parent=1 // pred_region
      _
    $region21: #{tpu_custom_call.1} parent=1 // pred_fallthru
      _
    // Predicated region
    $region22: #{tpu_custom_call.1} parent=1 // pred_check
      _
    $region23: #{tpu_custom_call.1} parent=1 // pred_check_branch
      %53 = sbr.rel (0) target = $region25
    $region24: #{tpu_custom_call.1} parent=1 // pred_region
      %55 = vsyncadd [#allocation6], 0
      %s56 = sshll.u32 %s5, 4
      %s57 = int_to_ptr.hbm [resolvable:$true] %s56
      %s58 = sshll.u32 [#allocation7], 4
      %s59 = int_to_ptr.vmem [resolvable:$true] %s58
      %64 = dma.hbm_to_vmem [thread:$0]  %s57, 2048, %s59, [#allocation6], 128, 128, 8
    $region25: #{tpu_custom_call.1} parent=1 // pred_fallthru
      _
    // Predicated region
    $region26: #{tpu_custom_call.1} parent=1 // pred_check
      _
    $region27: #{tpu_custom_call.1} parent=1 // pred_check_branch
      %66 = sbr.rel (0) target = $region29
    $region28: #{tpu_custom_call.1} parent=1 // pred_region
      _
    $region29: #{tpu_custom_call.1} parent=1 // pred_fallthru
      _
    // Predicated region
    $region30: #{tpu_custom_call.1} parent=1 // pred_check
      _
    $region31: #{tpu_custom_call.1} parent=1 // pred_check_branch
      %68 = sbr.rel (0) target = $region33
    $region32: #{tpu_custom_call.1} parent=1 // pred_region
      _
    $region33: #{tpu_custom_call.1} parent=1 // pred_fallthru
      _
    // Predicated region
    $region34: #{tpu_custom_call.1} parent=1 // pred_check
      _
    $region35: #{tpu_custom_call.1} parent=1 // pred_check_branch
      %70 = sbr.rel (0) target = $region37
    $region36: #{tpu_custom_call.1} parent=1 // pred_region
      _
    $region37: #{tpu_custom_call.1} parent=1 // pred_fallthru
      _
    // Predicated region
    $region38: #{tpu_custom_call.1} parent=1 // pred_check
      _
    $region39: #{tpu_custom_call.1} parent=1 // pred_check_branch
      %72 = sbr.rel (0) target = $region41
    $region40: #{tpu_custom_call.1} parent=1 // pred_region
      %74 = vsyncadd [#allocation9], 0
      %s75 = sshll.u32 %s9, 4
      %s76 = int_to_ptr.hbm [resolvable:$true] %s75
      %s77 = sshll.u32 [#allocation8], 4
      %s78 = int_to_ptr.vmem [resolvable:$true] %s77
      %83 = dma.hbm_to_vmem [thread:$0]  %s76, 2048, %s78, [#allocation9], 128, 128, 8
    $region41: #{tpu_custom_call.1} parent=1 // pred_fallthru
      _
    // Predicated region
    $region42: #{tpu_custom_call.1} parent=1 // pred_check
      _
    $region43: #{tpu_custom_call.1} parent=1 // pred_check_branch
      %85 = sbr.rel (0) target = $region45
    $region44: #{tpu_custom_call.1} parent=1 // pred_region
      _
    $region45: #{tpu_custom_call.1} parent=1 // pred_fallthru
      _
    // Predicated region
    $region46: #{tpu_custom_call.1} parent=1 // pred_check
      _
    $region47: #{tpu_custom_call.1} parent=1 // pred_check_branch
      %87 = sbr.rel (0) target = $region49
    $region48: #{tpu_custom_call.1} parent=1 // pred_region
      %89 = dma.done [#allocation3], 256
    $region49: #{tpu_custom_call.1} parent=1 // pred_fallthru
      _
    // Predicated region
    $region50: #{tpu_custom_call.1} parent=1 // pred_check
      _
    $region51: #{tpu_custom_call.1} parent=1 // pred_check_branch
      %91 = sbr.rel (0) target = $region53
    $region52: #{tpu_custom_call.1} parent=1 // pred_region
      %93 = dma.done [#allocation6], 2048
    $region53: #{tpu_custom_call.1} parent=1 // pred_fallthru
      _
    // Predicated region
    $region54: #{tpu_custom_call.1} parent=1 // pred_check
      _
    $region55: #{tpu_custom_call.1} parent=1 // pred_check_branch
      %95 = sbr.rel (0) target = $region57
    $region56: #{tpu_custom_call.1} parent=1 // pred_region
      %97 = dma.done [#allocation6], 2048
    $region57: #{tpu_custom_call.1} parent=1 // pred_fallthru
      _
    // Predicated region
    $region58: #{tpu_custom_call.1} parent=1 // pred_check
      _
    $region59: #{tpu_custom_call.1} parent=1 // pred_check_branch
      %99 = sbr.rel (0) target = $region61
    $region60: #{tpu_custom_call.1} parent=1 // pred_region
      %101 = dma.done [#allocation9], 2048
    $region61: #{tpu_custom_call.1} parent=1 // pred_fallthru
      _
    %v102 = vld [vmem:[#allocation2] sm:$0xff]
    %v103 = vld [vmem:[#allocation2 + $0x8] sm:$0xff]
    %v104 = vld [vmem:[#allocation5] sm:$0xff]
    %v105 = vld [vmem:[#allocation5 + $0x8] sm:$0xff]
    %v106 = vld [vmem:[#allocation5 + $0x10] sm:$0xff]
    %v107 = vld [vmem:[#allocation5 + $0x18] sm:$0xff]
    %v108 = vld [vmem:[#allocation5 + $0x20] sm:$0xff]
    %v109 = vld [vmem:[#allocation5 + $0x28] sm:$0xff]
    %v110 = vld [vmem:[#allocation5 + $0x30] sm:$0xff]
    %v111 = vld [vmem:[#allocation5 + $0x38] sm:$0xff]
    %v112 = vld [vmem:[#allocation5 + $0x40] sm:$0xff]
    %v113 = vld [vmem:[#allocation5 + $0x48] sm:$0xff]
    %v114 = vld [vmem:[#allocation5 + $0x50] sm:$0xff]
    %v115 = vld [vmem:[#allocation5 + $0x58] sm:$0xff]
    %v116 = vld [vmem:[#allocation5 + $0x60] sm:$0xff]
    %v117 = vld [vmem:[#allocation5 + $0x68] sm:$0xff]
    %v118 = vld [vmem:[#allocation5 + $0x70] sm:$0xff]
    %v119 = vld [vmem:[#allocation5 + $0x78] sm:$0xff]
    %v120 = vld [vmem:[%s2] sm:$0x1]
    %v122 = vperm.slane %v120, 0
    %124 = vmatpush.msra.mxu0 %v119
    %125 = vmatpush.msra.mxu0 %v118
    %126 = vmatpush.msra.mxu0 %v117
    %127 = vmatpush.msra.mxu0 %v116
    %128 = vmatpush.msra.mxu0 %v115
    %129 = vmatpush.msra.mxu0 %v114
    %130 = vmatpush.msra.mxu0 %v113
    %131 = vmatpush.msra.mxu0 %v112
    %132 = vmatpush.msra.mxu0 %v111
    %133 = vmatpush.msra.mxu0 %v110
    %134 = vmatpush.msra.mxu0 %v109
    %135 = vmatpush.msra.mxu0 %v108
    %136 = vmatpush.msra.mxu0 %v107
    %137 = vmatpush.msra.mxu0 %v106
    %138 = vmatpush.msra.mxu0 %v105
    %139 = vmatpush.msra.mxu0 %v104
    %140 = vmatmul.f32.gmra.mxu0 %v102
    %v141 = vpop.f32.mrf.mxu0
    %v142 = vadd.f32 %v122, %v141
    %143 = vmatmul.f32.gmra.mxu0 %v103
    %v144 = vpop.f32.mrf.mxu0
    %v145 = vadd.f32 %v122, %v144
    %146 = vdwg.mxu0
    %v147 = vld [vmem:[%s3] sm:$0x1]
    %v148 = vld [vmem:[%s4] sm:$0x1]
    %149 = vadd.xlane.f32.xlu0 %v142
    %v150 = vpop.xlane.xlu0 %149
    %151 = vadd.xlane.f32.xlu0 %v145
    %v152 = vpop.xlane.xlu0 %151
    %v153 = vmul.f32 %v142, %v142
    %v154 = vmul.f32 %v145, %v145
    %155 = vadd.xlane.f32.xlu0 %v153
    %v156 = vpop.xlane.xlu0 %155
    %157 = vadd.xlane.f32.xlu0 %v154
    %v158 = vpop.xlane.xlu0 %157
    %v159 = vmul.f32 %v150, 0.03125
    %v160 = vmul.f32 %v152, 0.03125
    %v161 = vmul.f32 %v156, 0.03125
    %v162 = vmul.f32 %v158, 0.03125
    %v163 = vmul.f32 %v159, %v159
    %v164 = vmul.f32 %v160, %v160
    %v165 = vsub.f32 %v161, %v163
    %v166 = vsub.f32 %v162, %v164
    %v167 = vmax.f32 %v165, 0.0
    %v168 = vmax.f32 %v166, 0.0
    %v169 = vadd.f32 %v167, 1e-05
    %v170 = vadd.f32 %v168, 1e-05
    %v171 = vrsqrt.pop %v169
    %v172 = vmul.f32 %v171, %v169
    %v173 = vmul.f32 %v172, %v171
    %v174 = vmul.f32 0.5, %v173
    %v175 = vsub.f32 1.5, %v174
    %v176 = vmul.f32 %v171, %v175
    %vm177 = vweird.f32 %v169
    %vm178 = vweird.f32 %v171
    %vm179 = vmor %vm177, %vm178
    %v180 = vsel %vm179, %v171, %v176
    %v181 = vrsqrt.pop %v170
    %v182 = vmul.f32 %v181, %v170
    %v183 = vmul.f32 %v182, %v181
    %v184 = vmul.f32 0.5, %v183
    %v185 = vsub.f32 1.5, %v184
    %v186 = vmul.f32 %v181, %v185
    %vm187 = vweird.f32 %v170
    %vm188 = vweird.f32 %v181
    %vm189 = vmor %vm187, %vm188
    %v190 = vsel %vm189, %v181, %v186
    %v191 = vsub.f32 %v142, %v159
    %v192 = vsub.f32 %v145, %v160
    %v193 = vmul.f32 %v191, %v180
    %v194 = vmul.f32 %v192, %v190
    %v196 = vperm.slane %v147, 0
    %v198 = vmul.f32 %v193, %v196
    %v199 = vmul.f32 %v194, %v196
    %v201 = vperm.slane %v148, 0
    %v203 = vadd.f32 %v198, %v201
    %v204 = vadd.f32 %v199, %v201
    %v205 = vsub.f32 0.0, %v203
    %v206 = vsub.f32 0.0, %v204
    %v207 = vmul.f32 %v205, 1.442695
    %v208 = vpow.pop %v207
    %v209 = vmul.f32 %v206, 1.442695
    %v210 = vpow.pop %v209
    %v211 = vadd.f32 %v208, 1.0
    %v212 = vadd.f32 %v210, 1.0
    %v213 = vrcp.pop %v211
    %v214 = vmul.f32 %v211, %v213
    %v215 = vsub.f32 1.0, %v214
    %v216 = vmul.f32 %v213, %v215
    %v217 = vadd.f32 %v213, %v216
    %vm218 = vweird.f32 %v211
    %vm219 = vweird.f32 %v213
    %vm220 = vmor %vm218, %vm219
    %v221 = vsel %vm220, %v213, %v217
    %v222 = vand.u32 2147483647, %v211
    %vm223 = vcmp.eq.f32.partialorder %v222, 8.507059e+37
    %v224 = vand.u32 %v211, 2147483648
    %v225 = vor.u32 1.1754944e-38, %v224
    %v226 = vsel %vm223, %v225, %v221
    %v227 = vmul.f32 1.0, %v226
    %v228 = vrcp.pop %v212
    %v229 = vmul.f32 %v212, %v228
    %v230 = vsub.f32 1.0, %v229
    %v231 = vmul.f32 %v228, %v230
    %v232 = vadd.f32 %v228, %v231
    %vm233 = vweird.f32 %v212
    %vm234 = vweird.f32 %v228
    %vm235 = vmor %vm233, %vm234
    %v236 = vsel %vm235, %v228, %v232
    %v237 = vand.u32 2147483647, %v212
    %vm238 = vcmp.eq.f32.partialorder %v237, 8.507059e+37
    %v239 = vand.u32 %v212, 2147483648
    %v240 = vor.u32 1.1754944e-38, %v239
    %v241 = vsel %vm238, %v240, %v236
    %v242 = vmul.f32 1.0, %v241
    %v243 = vmul.f32 %v203, %v227
    %v244 = vmul.f32 %v204, %v242
    %v245 = vld [vmem:[#allocation7] sm:$0xff]
    %v246 = vld [vmem:[#allocation7 + $0x8] sm:$0xff]
    %v247 = vld [vmem:[#allocation7 + $0x10] sm:$0xff]
    %v248 = vld [vmem:[#allocation7 + $0x18] sm:$0xff]
    %v249 = vld [vmem:[#allocation7 + $0x20] sm:$0xff]
    %v250 = vld [vmem:[#allocation7 + $0x28] sm:$0xff]
    %v251 = vld [vmem:[#allocation7 + $0x30] sm:$0xff]
    %v252 = vld [vmem:[#allocation7 + $0x38] sm:$0xff]
    %v253 = vld [vmem:[#allocation7 + $0x40] sm:$0xff]
    %v254 = vld [vmem:[#allocation7 + $0x48] sm:$0xff]
    %v255 = vld [vmem:[#allocation7 + $0x50] sm:$0xff]
    %v256 = vld [vmem:[#allocation7 + $0x58] sm:$0xff]
    %v257 = vld [vmem:[#allocation7 + $0x60] sm:$0xff]
    %v258 = vld [vmem:[#allocation7 + $0x68] sm:$0xff]
    %v259 = vld [vmem:[#allocation7 + $0x70] sm:$0xff]
    %v260 = vld [vmem:[#allocation7 + $0x78] sm:$0xff]
    %v261 = vld [vmem:[%s6] sm:$0x1]
    %v263 = vperm.slane %v261, 0
    %265 = vmatpush.msra.mxu0 %v260
    %266 = vmatpush.msra.mxu0 %v259
    %267 = vmatpush.msra.mxu0 %v258
    %268 = vmatpush.msra.mxu0 %v257
    %269 = vmatpush.msra.mxu0 %v256
    %270 = vmatpush.msra.mxu0 %v255
    %271 = vmatpush.msra.mxu0 %v254
    %272 = vmatpush.msra.mxu0 %v253
    %273 = vmatpush.msra.mxu0 %v252
    %274 = vmatpush.msra.mxu0 %v251
    %275 = vmatpush.msra.mxu0 %v250
    %276 = vmatpush.msra.mxu0 %v249
    %277 = vmatpush.msra.mxu0 %v248
    %278 = vmatpush.msra.mxu0 %v247
    %279 = vmatpush.msra.mxu0 %v246
    %280 = vmatpush.msra.mxu0 %v245
    %281 = vmatmul.f32.gmra.mxu0 %v243
    %v282 = vpop.f32.mrf.mxu0
    %v283 = vadd.f32 %v263, %v282
    %284 = vmatmul.f32.gmra.mxu0 %v244
    %v285 = vpop.f32.mrf.mxu0
    %v286 = vadd.f32 %v263, %v285
    %287 = vdwg.mxu0
    %v288 = vld [vmem:[%s7] sm:$0x1]
    %v289 = vld [vmem:[%s8] sm:$0x1]
    %290 = vadd.xlane.f32.xlu0 %v283
    %v291 = vpop.xlane.xlu0 %290
    %292 = vadd.xlane.f32.xlu0 %v286
    %v293 = vpop.xlane.xlu0 %292
    %v294 = vmul.f32 %v283, %v283
    %v295 = vmul.f32 %v286, %v286
    %296 = vadd.xlane.f32.xlu0 %v294
    %v297 = vpop.xlane.xlu0 %296
    %298 = vadd.xlane.f32.xlu0 %v295
    %v299 = vpop.xlane.xlu0 %298
    %v300 = vmul.f32 %v291, 0.03125
    %v301 = vmul.f32 %v293, 0.03125
    %v302 = vmul.f32 %v297, 0.03125
    %v303 = vmul.f32 %v299, 0.03125
    %v304 = vmul.f32 %v300, %v300
    %v305 = vmul.f32 %v301, %v301
    %v306 = vsub.f32 %v302, %v304
    %v307 = vsub.f32 %v303, %v305
    %v308 = vmax.f32 %v306, 0.0
    %v309 = vmax.f32 %v307, 0.0
    %v310 = vadd.f32 %v308, 1e-05
    %v311 = vadd.f32 %v309, 1e-05
    %v312 = vrsqrt.pop %v310
    %v313 = vmul.f32 %v312, %v310
    %v314 = vmul.f32 %v313, %v312
    %v315 = vmul.f32 0.5, %v314
    %v316 = vsub.f32 1.5, %v315
    %v317 = vmul.f32 %v312, %v316
    %vm318 = vweird.f32 %v310
    %vm319 = vweird.f32 %v312
    %vm320 = vmor %vm318, %vm319
    %v321 = vsel %vm320, %v312, %v317
    %v322 = vrsqrt.pop %v311
    %v323 = vmul.f32 %v322, %v311
    %v324 = vmul.f32 %v323, %v322
    %v325 = vmul.f32 0.5, %v324
    %v326 = vsub.f32 1.5, %v325
    %v327 = vmul.f32 %v322, %v326
    %vm328 = vweird.f32 %v311
    %vm329 = vweird.f32 %v322
    %vm330 = vmor %vm328, %vm329
    %v331 = vsel %vm330, %v322, %v327
    %v332 = vsub.f32 %v283, %v300
    %v333 = vsub.f32 %v286, %v301
    %v334 = vmul.f32 %v332, %v321
    %v335 = vmul.f32 %v333, %v331
    %v337 = vperm.slane %v288, 0
    %v339 = vmul.f32 %v334, %v337
    %v340 = vmul.f32 %v335, %v337
    %v342 = vperm.slane %v289, 0
    %v344 = vadd.f32 %v339, %v342
    %v345 = vadd.f32 %v340, %v342
    %v346 = vsub.f32 0.0, %v344
    %v347 = vsub.f32 0.0, %v345
    %v348 = vmul.f32 %v346, 1.442695
    %v349 = vpow.pop %v348
    %v350 = vmul.f32 %v347, 1.442695
    %v351 = vpow.pop %v350
    %v352 = vadd.f32 %v349, 1.0
    %v353 = vadd.f32 %v351, 1.0
    %v354 = vrcp.pop %v352
    %v355 = vmul.f32 %v352, %v354
    %v356 = vsub.f32 1.0, %v355
    %v357 = vmul.f32 %v354, %v356
    %v358 = vadd.f32 %v354, %v357
    %vm359 = vweird.f32 %v352
    %vm360 = vweird.f32 %v354
    %vm361 = vmor %vm359, %vm360
    %v362 = vsel %vm361, %v354, %v358
    %v363 = vand.u32 2147483647, %v352
    %vm364 = vcmp.eq.f32.partialorder %v363, 8.507059e+37
    %v365 = vand.u32 %v352, 2147483648
    %v366 = vor.u32 1.1754944e-38, %v365
    %v367 = vsel %vm364, %v366, %v362
    %v368 = vmul.f32 1.0, %v367
    %v369 = vrcp.pop %v353
    %v370 = vmul.f32 %v353, %v369
    %v371 = vsub.f32 1.0, %v370
    %v372 = vmul.f32 %v369, %v371
    %v373 = vadd.f32 %v369, %v372
    %vm374 = vweird.f32 %v353
    %vm375 = vweird.f32 %v369
    %vm376 = vmor %vm374, %vm375
    %v377 = vsel %vm376, %v369, %v373
    %v378 = vand.u32 2147483647, %v353
    %vm379 = vcmp.eq.f32.partialorder %v378, 8.507059e+37
    %v380 = vand.u32 %v353, 2147483648
    %v381 = vor.u32 1.1754944e-38, %v380
    %v382 = vsel %vm379, %v381, %v377
    %v383 = vmul.f32 1.0, %v382
    %v384 = vmul.f32 %v344, %v368
    %v385 = vmul.f32 %v345, %v383
    %v386 = vld [vmem:[#allocation8] sm:$0xff]
    %v387 = vld [vmem:[#allocation8 + $0x8] sm:$0xff]
    %v388 = vld [vmem:[#allocation8 + $0x10] sm:$0xff]
    %v389 = vld [vmem:[#allocation8 + $0x18] sm:$0xff]
    %v390 = vld [vmem:[#allocation8 + $0x20] sm:$0xff]
    %v391 = vld [vmem:[#allocation8 + $0x28] sm:$0xff]
    %v392 = vld [vmem:[#allocation8 + $0x30] sm:$0xff]
    %v393 = vld [vmem:[#allocation8 + $0x38] sm:$0xff]
    %v394 = vld [vmem:[#allocation8 + $0x40] sm:$0xff]
    %v395 = vld [vmem:[#allocation8 + $0x48] sm:$0xff]
    %v396 = vld [vmem:[#allocation8 + $0x50] sm:$0xff]
    %v397 = vld [vmem:[#allocation8 + $0x58] sm:$0xff]
    %v398 = vld [vmem:[#allocation8 + $0x60] sm:$0xff]
    %v399 = vld [vmem:[#allocation8 + $0x68] sm:$0xff]
    %v400 = vld [vmem:[#allocation8 + $0x70] sm:$0xff]
    %v401 = vld [vmem:[#allocation8 + $0x78] sm:$0xff]
    %v402 = vld [vmem:[%s10] sm:$0x1]
    %v404 = vperm.slane %v402, 0
    %406 = vmatpush.msra.mxu0 %v401
    %407 = vmatpush.msra.mxu0 %v400
    %408 = vmatpush.msra.mxu0 %v399
    %409 = vmatpush.msra.mxu0 %v398
    %410 = vmatpush.msra.mxu0 %v397
    %411 = vmatpush.msra.mxu0 %v396
    %412 = vmatpush.msra.mxu0 %v395
    %413 = vmatpush.msra.mxu0 %v394
    %414 = vmatpush.msra.mxu0 %v393
    %415 = vmatpush.msra.mxu0 %v392
    %416 = vmatpush.msra.mxu0 %v391
    %417 = vmatpush.msra.mxu0 %v390
    %418 = vmatpush.msra.mxu0 %v389
    %419 = vmatpush.msra.mxu0 %v388
    %420 = vmatpush.msra.mxu0 %v387
    %421 = vmatpush.msra.mxu0 %v386
    %422 = vmatmul.f32.gmra.mxu0 %v384
    %v423 = vpop.f32.mrf.mxu0
    %v424 = vadd.f32 %v404, %v423
    %425 = vmatmul.f32.gmra.mxu0 %v385
    %v426 = vpop.f32.mrf.mxu0
    %v427 = vadd.f32 %v404, %v426
    %428 = vdwg.mxu0
    %429 = vst [vmem:[#allocation10] sm:$0xff] %v424
    %430 = vst [vmem:[#allocation10 + $0x8] sm:$0xff] %v427
    // Predicated region
    $region62: #{tpu_custom_call.1} parent=1 // pred_check
      _
    $region63: #{tpu_custom_call.1} parent=1 // pred_check_branch
      %432 = sbr.rel (0) target = $region65
    $region64: #{tpu_custom_call.1} parent=1 // pred_region
      %434 = vsyncadd [#allocation4], 0
      %s435 = sshll.u32 [#allocation10], 4
      %s436 = int_to_ptr.vmem [resolvable:$true] %s435
      %s437 = sshll.u32 %s11, 4
      %s438 = int_to_ptr.hbm [resolvable:$true] %s437
      %443 = dma.vmem_to_hbm [thread:$0]  %s436, 256, %s438, [#allocation4], 128, 128, 8
    $region65: #{tpu_custom_call.1} parent=1 // pred_fallthru
      _
    // Predicated region
    $region66: #{tpu_custom_call.1} parent=1 // pred_check
      _
    $region67: #{tpu_custom_call.1} parent=1 // pred_check_branch
      %445 = sbr.rel (0) target = $region69
    $region68: #{tpu_custom_call.1} parent=1 // pred_region
      %447 = dma.done [#allocation4], 256
    $region69: #{tpu_custom_call.1} parent=1 // pred_fallthru
      _
    %448 = vsyncpa [#allocation3], 1
    %449 = vsyncpa [#allocation6], 1
    %450 = vsyncpa [#allocation9], 1
    %451 = vsyncpa [#allocation4], 1

</llo_original>
